<compile_context>
chip_gen: v7x
topology: tpu7x:2x2x1
jax: 0.10.0
libtpu: 0.0.40
codegen_flags: <defaults>
</compile_context>

<pallas_src>
import math

import jax
import jax.numpy as jnp
from jax.experimental import pallas as pl
from jax.experimental.pallas import tpu as pltpu

HIDDEN = 128
LANE = 128


# -----------------------------------------------------------------------------
# Kernel: one batch tile per grid step, 3 MXU matmuls, dueling combine prefolded.
# -----------------------------------------------------------------------------
def _dueling_kernel(x_ref, w1_ref, b1_ref, wh_ref, bh_ref, wq_ref, bq_ref, q_ref):
    cdt = w1_ref.dtype  # matmul operand dtype (f32 or bf16)

    # feature = ReLU(x @ W1 + b1)                      (TB, in) @ (in, 128)
    feat = jnp.dot(x_ref[...], w1_ref[...], preferred_element_type=jnp.float32)
    feat = jnp.maximum(feat + b1_ref[...], 0.0).astype(cdt)

    # fused hidden = ReLU([adv_hidden || val_hidden])  (TB, 128) @ (128, 256)
    h = jnp.dot(feat, wh_ref[...], preferred_element_type=jnp.float32)
    h = jnp.maximum(h + bh_ref[...], 0.0).astype(cdt)

    # fused heads + dueling combine (mean/value-broadcast folded into weights)
    q = jnp.dot(h, wq_ref[...], preferred_element_type=jnp.float32) + bq_ref[...]
    q_ref[...] = q.astype(q_ref.dtype)  # lane-dense 128-wide store


def dueling_forward(x, fused_params, *, out_dim, tile_b=128):
    """Run the fused dueling forward pass. x: (B, in_dim) float32."""
    w1, b1, wh, bh, wq, bq = fused_params
    B, in_dim = x.shape
    n_lanes = wq.shape[1]
    cdt = w1.dtype

    bp = pl.cdiv(B, tile_b) * tile_b
    if bp != B:
        x = jnp.pad(x, ((0, bp - B), (0, 0)))
    x = x.astype(cdt)

    # Weights/biases: full-array blocks with constant index maps -> fetched to
    # VMEM once and kept resident across all batch tiles.
    weight_specs = [pl.BlockSpec(a.shape, lambda i: (0, 0))
                    for a in (w1, b1, wh, bh, wq, bq)]

    q_pad = pl.pallas_call(
        _dueling_kernel,
        out_shape=jax.ShapeDtypeStruct((bp, n_lanes), jnp.float32),
        grid=(bp // tile_b,),
        in_specs=[pl.BlockSpec((tile_b, in_dim), lambda i: (i, 0))] + weight_specs,
        out_specs=pl.BlockSpec((tile_b, n_lanes), lambda i: (i, 0)),
        compiler_params=pltpu.CompilerParams(
            dimension_semantics=("parallel",)),  # 2 TCs on v7x
    )(x, w1, b1, wh, bh, wq, bq)
    return q_pad[:B, :out_dim]


# -----------------------------------------------------------------------------
# Parameter construction (PyTorch-equivalent init + NoisyLinear noise buffers).
# Weights stored (in_features, out_features); biases as (1, out_features).
# -----------------------------------------------------------------------------
def init_params(key, in_dim, out_dim, std_init=0.5):
    def plain_linear(k, fan_in, fan_out):
        kw, kb = jax.random.split(k)
        bound = 1.0 / math.sqrt(fan_in)
        w = jax.random.uniform(kw, (fan_in, fan_out), jnp.float32, -bound, bound)
        b = jax.random.uniform(kb, (1, fan_out), jnp.float32, -bound, bound)
        return w, b

    def scale_noise(k, n):
        v = jax.random.normal(k, (n,), jnp.float32)
        return jnp.sign(v) * jnp.sqrt(jnp.abs(v))

    def noisy_linear(k, fan_in, fan_out):
        kw, kb, ki, ko = jax.random.split(k, 4)
        mu_range = 1.0 / math.sqrt(fan_in)
        w_mu = jax.random.uniform(kw, (fan_in, fan_out), jnp.float32, -mu_range, mu_range)
        w_sigma = jnp.full((fan_in, fan_out), std_init / math.sqrt(fan_in), jnp.float32)
        b_mu = jax.random.uniform(kb, (1, fan_out), jnp.float32, -mu_range, mu_range)
        b_sigma = jnp.full((1, fan_out), std_init / math.sqrt(fan_out), jnp.float32)
        eps_in = scale_noise(ki, fan_in)
        eps_out = scale_noise(ko, fan_out)
        w_eps = eps_in[:, None] * eps_out[None, :]   # (in, out) == ger(out,in).T
        b_eps = eps_out[None, :]
        return dict(w_mu=w_mu, w_sigma=w_sigma, w_eps=w_eps,
                    b_mu=b_mu, b_sigma=b_sigma, b_eps=b_eps)

    k1, k2, k3, k4, k5 = jax.random.split(key, 5)
    return dict(
        feature=plain_linear(k1, in_dim, HIDDEN),
        adv_hidden=noisy_linear(k2, HIDDEN, HIDDEN),
        adv_head=noisy_linear(k3, HIDDEN, out_dim),
        val_hidden=noisy_linear(k4, HIDDEN, HIDDEN),
        val_head=noisy_linear(k5, HIDDEN, 1),
    )


def _noisy_effective(p):
    w = p["w_mu"] + p["w_sigma"] * p["w_eps"]
    b = p["b_mu"] + p["b_sigma"] * p["b_eps"]
    return w, b


def prepare_inference_params(params, out_dim, compute_dtype=jnp.float32):
    """Fold NoisyLinear noise, branch fusion and the dueling mean into the
    weights once. Pure linear-algebra transform: mathematically identical to
    the PyTorch forward."""
    w1, b1 = params["feature"]
    wa1, ba1 = _noisy_effective(params["adv_hidden"])
    wa2, ba2 = _noisy_effective(params["adv_head"])
    wv1, bv1 = _noisy_effective(params["val_hidden"])
    wv2, bv2 = _noisy_effective(params["val_head"])

    # Fused hidden layer: (128, 256) = [adv_hidden || value_hidden].
    wh = jnp.concatenate([wa1, wv1], axis=1)
    bh = jnp.concatenate([ba1, bv1], axis=1)

    # Fold q = V + A - mean(A):  A' = A @ (I - 1/out_dim)  =>  q = V + A'.
    proj = jnp.eye(out_dim, dtype=jnp.float32) - 1.0 / out_dim
    wa2p = wa2 @ proj
    ba2p = ba2 @ proj
    # Fused head over concat([adv_hidden_act, val_hidden_act]):
    #   q[:, j] = ah @ wa2p[:, j] + vh @ wv2[:, 0] + ba2p[j] + bv2
    wq = jnp.concatenate([wa2p, jnp.tile(wv2, (1, out_dim))], axis=0)  # (256, out_dim)
    bq = ba2p + bv2                                                    # (1, out_dim)

    # Pad the head to a lane-dense 128-wide output (padded lanes produce 0).
    n_lanes = pl.cdiv(out_dim, LANE) * LANE
    wq = jnp.pad(wq, ((0, 0), (0, n_lanes - out_dim)))
    bq = jnp.pad(bq, ((0, 0), (0, n_lanes - out_dim)))

    cdt = compute_dtype
    # Matmul operands in compute_dtype; biases stay f32 (f32 epilogue on v5e).
    return (w1.astype(cdt), b1, wh.astype(cdt), bh, wq.astype(cdt), bq)


def dueling_ref(x, params):
    """Plain-JAX reference matching the PyTorch forward exactly (unfused)."""
    w1, b1 = params["feature"]
    wa1, ba1 = _noisy_effective(params["adv_hidden"])
    wa2, ba2 = _noisy_effective(params["adv_head"])
    wv1, bv1 = _noisy_effective(params["val_hidden"])
    wv2, bv2 = _noisy_effective(params["val_head"])
    feat = jnp.maximum(x @ w1 + b1, 0.0)
    adv = jnp.maximum(feat @ wa1 + ba1, 0.0) @ wa2 + ba2
    val = jnp.maximum(feat @ wv1 + bv1, 0.0) @ wv2 + bv2
    return val + adv - adv.mean(axis=-1, keepdims=True)


if __name__ == "__main__":
    in_dim, out_dim = 32, 8
    B, TILE_B = 256, 128  # 2 batch tiles -> exercises the parallel grid

    key = jax.random.PRNGKey(0)
    kx, kp = jax.random.split(key)
    x = jax.random.normal(kx, (B, in_dim), jnp.float32)
    params = init_params(kp, in_dim, out_dim)

    q_ref = dueling_ref(x, params)

    # f32 path: matches the reference up to f32 reassociation.
    fused_f32 = prepare_inference_params(params, out_dim, jnp.float32)
    q = jax.block_until_ready(dueling_forward(x, fused_f32, out_dim=out_dim, tile_b=TILE_B))
    assert q.shape == (B, out_dim)
    assert jnp.allclose(q, q_ref, atol=1e-4, rtol=1e-4), (
        f"f32 max abs err = {jnp.max(jnp.abs(q - q_ref))}")

    # bf16 matmul operands (f32 accumulation + f32 epilogue): looser tolerance.
    fused_bf16 = prepare_inference_params(params, out_dim, jnp.bfloat16)
    q16 = jax.block_until_ready(dueling_forward(x, fused_bf16, out_dim=out_dim, tile_b=TILE_B))
    assert jnp.allclose(q16, q_ref, atol=1e-1, rtol=1e-1), (
        f"bf16 max abs err = {jnp.max(jnp.abs(q16 - q_ref))}")

    print("KERNEL_OK")
</pallas_src>

<mosaic_0001>
module attributes {stable_mosaic.version = 11 : i64} {
  func.func @_dueling_kernel(%arg0: i32, %arg1: memref<128x32xf32, #tpu.memory_space<vmem>>, %arg2: memref<32x128xf32, #tpu.memory_space<vmem>>, %arg3: memref<1x128xf32, #tpu.memory_space<vmem>>, %arg4: memref<128x256xf32, #tpu.memory_space<vmem>>, %arg5: memref<1x256xf32, #tpu.memory_space<vmem>>, %arg6: memref<256x128xf32, #tpu.memory_space<vmem>>, %arg7: memref<1x128xf32, #tpu.memory_space<vmem>>, %arg8: memref<128x128xf32, #tpu.memory_space<vmem>>) attributes {dimension_semantics = [#tpu.dimension_semantics<parallel>], iteration_bounds = array<i64: 2>, scalar_prefetch = 0 : i64, scratch_operands = 0 : i64, tpu.core_type = #tpu.core_type<tc>, window_params = [{transform_indices = @transform_0, window_bounds = array<i64: 128, 32>}, {pipeline_mode = #tpu.pipeline_mode<synchronous>, transform_indices = @transform_1, window_bounds = array<i64: 32, 128>}, {pipeline_mode = #tpu.pipeline_mode<synchronous>, transform_indices = @transform_2, window_bounds = array<i64: 1, 128>}, {pipeline_mode = #tpu.pipeline_mode<synchronous>, transform_indices = @transform_3, window_bounds = array<i64: 128, 256>}, {pipeline_mode = #tpu.pipeline_mode<synchronous>, transform_indices = @transform_4, window_bounds = array<i64: 1, 256>}, {pipeline_mode = #tpu.pipeline_mode<synchronous>, transform_indices = @transform_5, window_bounds = array<i64: 256, 128>}, {pipeline_mode = #tpu.pipeline_mode<synchronous>, transform_indices = @transform_6, window_bounds = array<i64: 1, 128>}, {transform_indices = @transform_7, window_bounds = array<i64: 128, 128>}]} {
    %c0 = arith.constant 0 : index
    %c0_0 = arith.constant 0 : index
    %0 = vector.load %arg1[%c0, %c0_0] : memref<128x32xf32, #tpu.memory_space<vmem>>, vector<128x32xf32>
    %c0_1 = arith.constant 0 : index
    %c0_2 = arith.constant 0 : index
    %1 = vector.load %arg2[%c0_1, %c0_2] : memref<32x128xf32, #tpu.memory_space<vmem>>, vector<32x128xf32>
    %cst = arith.constant dense<0.000000e+00> : vector<128x128xf32>
    %2 = tpu.matmul %0, %1, %cst {dimension_numbers = #tpu.dot_dimension_numbers<[1], [0], [0], [1], [0, 0, 1, 1], [], []>} : vector<128x32xf32>, vector<32x128xf32>, vector<128x128xf32> -> vector<128x128xf32>
    %c0_3 = arith.constant 0 : index
    %c0_4 = arith.constant 0 : index
    %3 = vector.load %arg3[%c0_3, %c0_4] : memref<1x128xf32, #tpu.memory_space<vmem>>, vector<1x128xf32>
    %4 = vector.broadcast %3 : vector<1x128xf32> to vector<128x128xf32>
    %5 = arith.addf %2, %4 : vector<128x128xf32>
    %cst_5 = arith.constant 0.000000e+00 : f32
    %6 = vector.broadcast %cst_5 : f32 to vector<128x128xf32>
    %7 = arith.maximumf %5, %6 : vector<128x128xf32>
    %c0_6 = arith.constant 0 : index
    %c0_7 = arith.constant 0 : index
    %8 = vector.load %arg4[%c0_6, %c0_7] : memref<128x256xf32, #tpu.memory_space<vmem>>, vector<128x256xf32>
    %cst_8 = arith.constant dense<0.000000e+00> : vector<128x256xf32>
    %9 = tpu.matmul %7, %8, %cst_8 {dimension_numbers = #tpu.dot_dimension_numbers<[1], [0], [0], [1], [0, 0, 1, 1], [], []>} : vector<128x128xf32>, vector<128x256xf32>, vector<128x256xf32> -> vector<128x256xf32>
    %c0_9 = arith.constant 0 : index
    %c0_10 = arith.constant 0 : index
    %10 = vector.load %arg5[%c0_9, %c0_10] : memref<1x256xf32, #tpu.memory_space<vmem>>, vector<1x256xf32>
    %11 = vector.broadcast %10 : vector<1x256xf32> to vector<128x256xf32>
    %12 = arith.addf %9, %11 : vector<128x256xf32>
    %cst_11 = arith.constant 0.000000e+00 : f32
    %13 = vector.broadcast %cst_11 : f32 to vector<128x256xf32>
    %14 = arith.maximumf %12, %13 : vector<128x256xf32>
    %c0_12 = arith.constant 0 : index
    %c0_13 = arith.constant 0 : index
    %15 = vector.load %arg6[%c0_12, %c0_13] : memref<256x128xf32, #tpu.memory_space<vmem>>, vector<256x128xf32>
    %cst_14 = arith.constant dense<0.000000e+00> : vector<128x128xf32>
    %16 = tpu.matmul %14, %15, %cst_14 {dimension_numbers = #tpu.dot_dimension_numbers<[1], [0], [0], [1], [0, 0, 1, 1], [], []>} : vector<128x256xf32>, vector<256x128xf32>, vector<128x128xf32> -> vector<128x128xf32>
    %c0_15 = arith.constant 0 : index
    %c0_16 = arith.constant 0 : index
    %17 = vector.load %arg7[%c0_15, %c0_16] : memref<1x128xf32, #tpu.memory_space<vmem>>, vector<1x128xf32>
    %18 = vector.broadcast %17 : vector<1x128xf32> to vector<128x128xf32>
    %19 = arith.addf %16, %18 : vector<128x128xf32>
    %c0_17 = arith.constant 0 : index
    %c0_18 = arith.constant 0 : index
    %20 = vector.load %arg8[%c0_17, %c0_18] : memref<128x128xf32, #tpu.memory_space<vmem>>, vector<128x128xf32>
    tpu.vector_store %arg8[%c0_17, %c0_18], %19 {strides = array<i32>} : memref<128x128xf32, #tpu.memory_space<vmem>>, vector<128x128xf32>,
    return
  }
  func.func @transform_0(%arg0: i32) -> (i32, i32) {
    %c0_i32 = arith.constant 0 : i32
    %c0_i32_0 = arith.constant 0 : i32
    return %arg0, %c0_i32 : i32, i32
  }
  func.func @transform_1(%arg0: i32) -> (i32, i32) {
    %c0_i32 = arith.constant 0 : i32
    %c0_i32_0 = arith.constant 0 : i32
    %c0_i32_1 = arith.constant 0 : i32
    return %c0_i32, %c0_i32_0 : i32, i32
  }
  func.func @transform_2(%arg0: i32) -> (i32, i32) {
    %c0_i32 = arith.constant 0 : i32
    %c0_i32_0 = arith.constant 0 : i32
    %c0_i32_1 = arith.constant 0 : i32
    return %c0_i32, %c0_i32_0 : i32, i32
  }
  func.func @transform_3(%arg0: i32) -> (i32, i32) {
    %c0_i32 = arith.constant 0 : i32
    %c0_i32_0 = arith.constant 0 : i32
    %c0_i32_1 = arith.constant 0 : i32
    return %c0_i32, %c0_i32_0 : i32, i32
  }
  func.func @transform_4(%arg0: i32) -> (i32, i32) {
    %c0_i32 = arith.constant 0 : i32
    %c0_i32_0 = arith.constant 0 : i32
    %c0_i32_1 = arith.constant 0 : i32
    return %c0_i32, %c0_i32_0 : i32, i32
  }
  func.func @transform_5(%arg0: i32) -> (i32, i32) {
    %c0_i32 = arith.constant 0 : i32
    %c0_i32_0 = arith.constant 0 : i32
    %c0_i32_1 = arith.constant 0 : i32
    return %c0_i32, %c0_i32_0 : i32, i32
  }
  func.func @transform_6(%arg0: i32) -> (i32, i32) {
    %c0_i32 = arith.constant 0 : i32
    %c0_i32_0 = arith.constant 0 : i32
    %c0_i32_1 = arith.constant 0 : i32
    return %c0_i32, %c0_i32_0 : i32, i32
  }
  func.func @transform_7(%arg0: i32) -> (i32, i32) {
    %c0_i32 = arith.constant 0 : i32
    %c0_i32_0 = arith.constant 0 : i32
    return %arg0, %c0_i32 : i32, i32
  }
}

</mosaic_0001>

<llo_original>
// kernel: tpu_custom_call.1
$region0: #{tpu_custom_call.1}
  #allocation0 [shape = 'u32[]', space=smem, size = 0x4, offset = 0x4, fixed_abs, tag = 'smem constant byte address 0x4 - core index']
  #allocation1 [shape = 'u32[144,128]{1,0:T(1,128)}', space=vmem, size = 0x12000, scoped, tag = 'internal scratch']
  %s0 = inlined_call_operand.vmem [shape: f32[256,32], index: 0, kind: input, shape index: {}]
  %s1 = inlined_call_operand.vmem [shape: f32[32,128], index: 1, kind: input, shape index: {}]
  %s2 = inlined_call_operand.vmem [shape: f32[1,128], index: 2, kind: input, shape index: {}]
  %s3 = inlined_call_operand.vmem [shape: f32[128,256], index: 3, kind: input, shape index: {}]
  %s4 = inlined_call_operand.vmem [shape: f32[1,256], index: 4, kind: input, shape index: {}]
  %s5 = inlined_call_operand.hbm [shape: f32[256,128], index: 5, kind: input, shape index: {}]
  %s6 = inlined_call_operand.vmem [shape: f32[1,128], index: 6, kind: input, shape index: {}]
  %s7 = inlined_call_operand.hbm [shape: f32[256,128], index: 7, kind: output, shape index: {}]
  %s8 = sld [smem:[#allocation0]]
  $region65: #{tpu_custom_call.1} parent=0
    _
  %s10 = ssub.s32 1, %s8
  %s11 = scalar_select 0, %s10, %s8
  $region1: #{tpu_custom_call.1} parent=0
    #allocation2 [shape = 'u8[131072]{0}', space=vmem, size = 0x20000, scoped, tag = 'input window, operand 5, single buffered']
    #allocation3 [shape = 's32[2]{0}', space=sflag, size = 0x8, scoped, tag = 'scoped memory for tpu_custom_call.1']
    #allocation4 [shape = 's32[2]{0}', space=sflag, size = 0x8, scoped, tag = 'scoped memory for tpu_custom_call.1']
    #allocation5 [shape = 'u8[131072]{0}', space=vmem, size = 0x20000, scoped, tag = 'output window, operand 0']
    %12 = vsyncpa [#allocation3], 0
    %13 = vsyncpa [#allocation4], 0
    %s14 = scalar_lea.sflag [#allocation4], 1
    %15 = vsyncpa %s14, 0
    loop: start=0, step=1, limit=4
    $region2: #{tpu_custom_call.1} parent=1 // loop_pre_header
      _
    $region3: #{tpu_custom_call.1} parent=1 // loop_header
      %s17 = sphi 0, %s21
      %p18 = scmp.ge.s32.totalorder %s17, 4
      %s27 = sphi 0, %s29
      %s30 = sphi 0, %s27
      %s31 = sphi 0, %s30
      %s47 = sphi 0, %s31
      %s51 = sphi 0, %s51
      %s53 = sphi 0, %s51
      %s54 = sphi 0, %s53
      %s68 = sphi 0, %s54
      %s72 = sphi 0, %s72
      %s74 = sphi 0, %s72
      %s75 = sphi 0, %s74
      %s89 = sphi 0, %s75
      %s93 = sphi 0, %s93
      %s95 = sphi 0, %s93
      %s96 = sphi 0, %s95
      %s110 = sphi 0, %s96
      %s114 = sphi 0, %s114
      %s116 = sphi 0, %s114
      %s117 = sphi 0, %s116
      %s131 = sphi 0, %s117
      %s135 = sphi 0, %s135
      %s137 = sphi 0, %s135
      %s138 = sphi 0, %s137
      %s152 = sphi 0, %s138
      %s156 = sphi 0, %s156
      %s158 = sphi 0, %s156
      %s159 = sphi 0, %s158
      %s173 = sphi 0, %s159
      %s179 = sphi 0, %s181
      %s182 = sphi 0, %s179
      %s183 = sphi 0, %s182
      %s199 = sphi 0, %s183
    $region4: #{tpu_custom_call.1} parent=1 // loop_header_branch
      %20 = sbr.rel (%p18) target = $region8
    $region5: #{tpu_custom_call.1} parent=1 // loop_body
      %s22 = ssub.s32 %s17, 1
      %s23 = ssub.s32 %s17, 2
      %s24 = sadd.s32 %s17, 1
      %s25 = ssub.s32 %s17, %s24
      %p26 = scmp.eq.s32.totalorder %s25, 0
      %s28 = sadd.s32 %s27, 1
      %s29 = scalar_select %p26, %s27, %s28
      %p32 = pneg %p26
      %p33 = scmp.eq.s32.totalorder %s17, 1
      %p34 = por %p32, %p33
      %p35 = scmp.ne.s32.totalorder %s27, %s30
      %p36 = scmp.eq.s32.totalorder %s17, 0
      %p37 = por %p35, %p36
      %p38 = scmp.ne.s32.totalorder %s27, %s30
      %p39 = scmp.eq.s32.totalorder %s22, 1
      %p40 = por %p38, %p39
      %p41 = scmp.ne.s32.totalorder %s30, %s31
      %p42 = scmp.eq.s32.totalorder %s22, 0
      %p43 = por %p41, %p42
      %p44 = scmp.ne.s32.totalorder %s30, %s31
      %p45 = scmp.eq.s32.totalorder %s23, 1
      %p46 = por %p44, %p45
      %p48 = scmp.ne.s32.totalorder %s31, %s47
      %p49 = scmp.eq.s32.totalorder %s23, 0
      %p50 = por %p48, %p49
      %s52 = sadd.s32 %s51, 1
      %p55 = scmp.eq.s32.totalorder %s17, 1
      %p56 = scmp.ne.s32.totalorder %s51, %s53
      %p57 = scmp.eq.s32.totalorder %s17, 0
      %p58 = por %p56, %p57
      %p59 = scmp.ne.s32.totalorder %s51, %s53
      %p60 = scmp.eq.s32.totalorder %s22, 1
      %p61 = por %p59, %p60
      %p62 = scmp.ne.s32.totalorder %s53, %s54
      %p63 = scmp.eq.s32.totalorder %s22, 0
      %p64 = por %p62, %p63
      %p65 = scmp.ne.s32.totalorder %s53, %s54
      %p66 = scmp.eq.s32.totalorder %s23, 1
      %p67 = por %p65, %p66
      %p69 = scmp.ne.s32.totalorder %s54, %s68
      %p70 = scmp.eq.s32.totalorder %s23, 0
      %p71 = por %p69, %p70
      %s73 = sadd.s32 %s72, 1
      %p76 = scmp.eq.s32.totalorder %s17, 1
      %p77 = scmp.ne.s32.totalorder %s72, %s74
      %p78 = scmp.eq.s32.totalorder %s17, 0
      %p79 = por %p77, %p78
      %p80 = scmp.ne.s32.totalorder %s72, %s74
      %p81 = scmp.eq.s32.totalorder %s22, 1
      %p82 = por %p80, %p81
      %p83 = scmp.ne.s32.totalorder %s74, %s75
      %p84 = scmp.eq.s32.totalorder %s22, 0
      %p85 = por %p83, %p84
      %p86 = scmp.ne.s32.totalorder %s74, %s75
      %p87 = scmp.eq.s32.totalorder %s23, 1
      %p88 = por %p86, %p87
      %p90 = scmp.ne.s32.totalorder %s75, %s89
      %p91 = scmp.eq.s32.totalorder %s23, 0
      %p92 = por %p90, %p91
      %s94 = sadd.s32 %s93, 1
      %p97 = scmp.eq.s32.totalorder %s17, 1
      %p98 = scmp.ne.s32.totalorder %s93, %s95
      %p99 = scmp.eq.s32.totalorder %s17, 0
      %p100 = por %p98, %p99
      %p101 = scmp.ne.s32.totalorder %s93, %s95
      %p102 = scmp.eq.s32.totalorder %s22, 1
      %p103 = por %p101, %p102
      %p104 = scmp.ne.s32.totalorder %s95, %s96
      %p105 = scmp.eq.s32.totalorder %s22, 0
      %p106 = por %p104, %p105
      %p107 = scmp.ne.s32.totalorder %s95, %s96
      %p108 = scmp.eq.s32.totalorder %s23, 1
      %p109 = por %p107, %p108
      %p111 = scmp.ne.s32.totalorder %s96, %s110
      %p112 = scmp.eq.s32.totalorder %s23, 0
      %p113 = por %p111, %p112
      %s115 = sadd.s32 %s114, 1
      %p118 = scmp.eq.s32.totalorder %s17, 1
      %p119 = scmp.ne.s32.totalorder %s114, %s116
      %p120 = scmp.eq.s32.totalorder %s17, 0
      %p121 = por %p119, %p120
      %p122 = scmp.ne.s32.totalorder %s114, %s116
      %p123 = scmp.eq.s32.totalorder %s22, 1
      %p124 = por %p122, %p123
      %p125 = scmp.ne.s32.totalorder %s116, %s117
      %p126 = scmp.eq.s32.totalorder %s22, 0
      %p127 = por %p125, %p126
      %p128 = scmp.ne.s32.totalorder %s116, %s117
      %p129 = scmp.eq.s32.totalorder %s23, 1
      %p130 = por %p128, %p129
      %p132 = scmp.ne.s32.totalorder %s117, %s131
      %p133 = scmp.eq.s32.totalorder %s23, 0
      %p134 = por %p132, %p133
      %s136 = sadd.s32 %s135, 1
      %p139 = scmp.eq.s32.totalorder %s17, 1
      %p140 = scmp.ne.s32.totalorder %s135, %s137
      %p141 = scmp.eq.s32.totalorder %s17, 0
      %p142 = por %p140, %p141
      %p143 = scmp.ne.s32.totalorder %s135, %s137
      %p144 = scmp.eq.s32.totalorder %s22, 1
      %p145 = por %p143, %p144
      %p146 = scmp.ne.s32.totalorder %s137, %s138
      %p147 = scmp.eq.s32.totalorder %s22, 0
      %p148 = por %p146, %p147
      %p149 = scmp.ne.s32.totalorder %s137, %s138
      %p150 = scmp.eq.s32.totalorder %s23, 1
      %p151 = por %p149, %p150
      %p153 = scmp.ne.s32.totalorder %s138, %s152
      %p154 = scmp.eq.s32.totalorder %s23, 0
      %p155 = por %p153, %p154
      %s157 = sadd.s32 %s156, 1
      %p160 = scmp.eq.s32.totalorder %s17, 1
      %p161 = scmp.ne.s32.totalorder %s156, %s158
      %p162 = scmp.eq.s32.totalorder %s17, 0
      %p163 = por %p161, %p162
      %p164 = scmp.ne.s32.totalorder %s156, %s158
      %p165 = scmp.eq.s32.totalorder %s22, 1
      %p166 = por %p164, %p165
      %p167 = scmp.ne.s32.totalorder %s158, %s159
      %p168 = scmp.eq.s32.totalorder %s22, 0
      %p169 = por %p167, %p168
      %p170 = scmp.ne.s32.totalorder %s158, %s159
      %p171 = scmp.eq.s32.totalorder %s23, 1
      %p172 = por %p170, %p171
      %p174 = scmp.ne.s32.totalorder %s159, %s173
      %p175 = scmp.eq.s32.totalorder %s23, 0
      %p176 = por %p174, %p175
      %s177 = ssub.s32 %s17, %s24
      %p178 = scmp.eq.s32.totalorder %s177, 0
      %s180 = sadd.s32 %s179, 1
      %s181 = scalar_select %p178, %s179, %s180
      %p184 = pneg %p178
      %p185 = scmp.eq.s32.totalorder %s17, 1
      %p186 = por %p184, %p185
      %p187 = scmp.ne.s32.totalorder %s179, %s182
      %p188 = scmp.eq.s32.totalorder %s17, 0
      %p189 = por %p187, %p188
      %p190 = scmp.ne.s32.totalorder %s179, %s182
      %p191 = scmp.eq.s32.totalorder %s22, 1
      %p192 = por %p190, %p191
      %p193 = scmp.ne.s32.totalorder %s182, %s183
      %p194 = scmp.eq.s32.totalorder %s22, 0
      %p195 = por %p193, %p194
      %p196 = scmp.ne.s32.totalorder %s182, %s183
      %p197 = scmp.eq.s32.totalorder %s23, 1
      %p198 = por %p196, %p197
      %p200 = scmp.ne.s32.totalorder %s183, %s199
      %p201 = scmp.eq.s32.totalorder %s23, 0
      %p202 = por %p200, %p201
      %p203 = scmp.le.s32.totalorder 1, %s17
      %p204 = scmp.lt.s32.totalorder %s17, 3
      %p205 = pnand %p203, %p204
      %p206 = pneg %p205
      // Predicated region
      $region9: #{tpu_custom_call.1} parent=5 // pred_check
        _
      $region10: #{tpu_custom_call.1} parent=5 // pred_check_branch
        %208 = sbr.rel (%p205) target = $region12
      $region11: #{tpu_custom_call.1} parent=5 // pred_region
        %s209 = ssub.s32 %s17, 1
        // Predicated region
        $region13: #{tpu_custom_call.1} parent=11 // pred_check
          %p210 = pneg %p64
        $region14: #{tpu_custom_call.1} parent=11 // pred_check_branch
          %212 = sbr.rel (%p210) target = $region16
        $region15: #{tpu_custom_call.1} parent=11 // pred_region
          _
        $region16: #{tpu_custom_call.1} parent=11 // pred_fallthru
          _
        // Predicated region
        $region17: #{tpu_custom_call.1} parent=11 // pred_check
          %p213 = pneg %p85
        $region18: #{tpu_custom_call.1} parent=11 // pred_check_branch
          %215 = sbr.rel (%p213) target = $region20
        $region19: #{tpu_custom_call.1} parent=11 // pred_region
          _
        $region20: #{tpu_custom_call.1} parent=11 // pred_fallthru
          _
        // Predicated region
        $region21: #{tpu_custom_call.1} parent=11 // pred_check
          %p216 = pneg %p106
        $region22: #{tpu_custom_call.1} parent=11 // pred_check_branch
          %218 = sbr.rel (%p216) target = $region24
        $region23: #{tpu_custom_call.1} parent=11 // pred_region
          _
        $region24: #{tpu_custom_call.1} parent=11 // pred_fallthru
          _
        // Predicated region
        $region25: #{tpu_custom_call.1} parent=11 // pred_check
          %p219 = pneg %p127
        $region26: #{tpu_custom_call.1} parent=11 // pred_check_branch
          %221 = sbr.rel (%p219) target = $region28
        $region27: #{tpu_custom_call.1} parent=11 // pred_region
          _
        $region28: #{tpu_custom_call.1} parent=11 // pred_fallthru
          _
        // Predicated region
        $region29: #{tpu_custom_call.1} parent=11 // pred_check
          %p222 = pneg %p148
        $region30: #{tpu_custom_call.1} parent=11 // pred_check_branch
          %224 = sbr.rel (%p222) target = $region32
        $region31: #{tpu_custom_call.1} parent=11 // pred_region
          %s226 = ssub.s32 4096, 4096
          %227 = vsyncadd [#allocation3], %s226
          %s228 = sshll.u32 [#allocation2], 4
          %s229 = int_to_ptr.vmem [resolvable:$true] %s228
          %234 = dma.hbm_to_vmem [thread:$0]  %s5, 4096, %s229, [#allocation3], 128, 128, 8
        $region32: #{tpu_custom_call.1} parent=11 // pred_fallthru
          _
        // Predicated region
        $region33: #{tpu_custom_call.1} parent=11 // pred_check
          %p235 = pneg %p169
        $region34: #{tpu_custom_call.1} parent=11 // pred_check_branch
          %237 = sbr.rel (%p235) target = $region36
        $region35: #{tpu_custom_call.1} parent=11 // pred_region
          _
        $region36: #{tpu_custom_call.1} parent=11 // pred_fallthru
          _
      $region12: #{tpu_custom_call.1} parent=5 // pred_fallthru
        _
      %p238 = scmp.lt.s32.totalorder %s17, 2
      // Predicated region
      $region37: #{tpu_custom_call.1} parent=5 // pred_check
        %p239 = pneg %p238
      $region38: #{tpu_custom_call.1} parent=5 // pred_check_branch
        %241 = sbr.rel (%p239) target = $region40
      $region39: #{tpu_custom_call.1} parent=5 // pred_region
        // Predicated region
        $region41: #{tpu_custom_call.1} parent=39 // pred_check
          %p242 = pneg %p37
        $region42: #{tpu_custom_call.1} parent=39 // pred_check_branch
          %244 = sbr.rel (%p242) target = $region44
        $region43: #{tpu_custom_call.1} parent=39 // pred_region
          %s245 = smul.u32 16, %s17
          %p246 = scmp.lt.s32.totalorder %s245, 31
          %s247 = scalar_select %p246, %s245, 31
          %s248 = smul.addr %s247, 8
          %s249 = scalar_lea.vmem %s0, %s248
          %s250 = smul.u32 16, %s17
        $region44: #{tpu_custom_call.1} parent=39 // pred_fallthru
          _
      $region40: #{tpu_custom_call.1} parent=5 // pred_fallthru
        _
      %p251 = scmp.le.s32.totalorder 1, %s17
      %p252 = scmp.lt.s32.totalorder %s17, 3
      %p253 = pnand %p251, %p252
      %p254 = pneg %p253
      // Predicated region
      $region45: #{tpu_custom_call.1} parent=5 // pred_check
        _
      $region46: #{tpu_custom_call.1} parent=5 // pred_check_branch
        %256 = sbr.rel (%p253) target = $region48
      $region47: #{tpu_custom_call.1} parent=5 // pred_region
        %s257 = ssub.s32 %s17, 1
        // Predicated region
        $region49: #{tpu_custom_call.1} parent=47 // pred_check
          %p258 = pneg %p148
        $region50: #{tpu_custom_call.1} parent=47 // pred_check_branch
          %260 = sbr.rel (%p258) target = $region52
        $region51: #{tpu_custom_call.1} parent=47 // pred_region
          %261 = dma.done [#allocation3], 4096
        $region52: #{tpu_custom_call.1} parent=47 // pred_fallthru
          _
        %s262 = smul.u32 16, %s22
        %p263 = scmp.lt.s32.totalorder %s262, 31
        %s264 = scalar_select %p263, %s262, 31
        %s265 = smul.addr %s264, 8
        %s266 = scalar_lea.vmem %s0, %s265
        %p267 = pneg %p43
        %p268 = pneg %p40
        %p269 = pneg %p64
        %p270 = pneg %p61
        %p271 = pneg %p85
        %p272 = pneg %p82
        %p273 = pneg %p106
        %p274 = pneg %p103
        %p275 = pneg %p127
        %p276 = pneg %p124
        %p277 = pneg %p148
        %p278 = pneg %p145
        %p279 = pneg %p169
        %p280 = pneg %p166
        %p281 = pneg %p195
        %p282 = pneg %p192
        %s283 = sand.u32 %s182, 1
        %s284 = scalar_lea.sflag [#allocation4], %s283
        %s285 = sand.u32 %s182, 1
        %s286 = smul.addr %s285, 128
        %s287 = scalar_lea.vmem [#allocation5], %s286
        %s288 = smul.u32 16, %s22
        %p289 = scmp.lt.s32.totalorder %s288, 31
        %s290 = scalar_select %p289, %s288, 31
        %s291 = smul.addr %s290, 8
        %s292 = scalar_lea.vmem %s0, %s291
        %s293 = smul.u32 16, %s22
        %s294 = smul.u32 16, %s22
        %v295 = vld [vmem:[%s292] sm:$0xff]
        %v296 = vld [vmem:[%s292 + $0x8] sm:$0xff]
        %v297 = vld [vmem:[%s292 + $0x10] sm:$0xff]
        %v298 = vld [vmem:[%s292 + $0x18] sm:$0xff]
        %v299 = vld [vmem:[%s292 + $0x20] sm:$0xff]
        %v300 = vld [vmem:[%s292 + $0x28] sm:$0xff]
        %v301 = vld [vmem:[%s292 + $0x30] sm:$0xff]
        %v302 = vld [vmem:[%s292 + $0x38] sm:$0xff]
        %v303 = vld [vmem:[%s292 + $0x40] sm:$0xff]
        %v304 = vld [vmem:[%s292 + $0x48] sm:$0xff]
        %v305 = vld [vmem:[%s292 + $0x50] sm:$0xff]
        %v306 = vld [vmem:[%s292 + $0x58] sm:$0xff]
        %v307 = vld [vmem:[%s292 + $0x60] sm:$0xff]
        %v308 = vld [vmem:[%s292 + $0x68] sm:$0xff]
        %v309 = vld [vmem:[%s292 + $0x70] sm:$0xff]
        %v310 = vld [vmem:[%s292 + $0x78] sm:$0xff]
        %v311 = vld [vmem:[%s1] sm:$0xff]
        %v312 = vld [vmem:[%s1 + $0x8] sm:$0xff]
        %v313 = vld [vmem:[%s1 + $0x10] sm:$0xff]
        %v314 = vld [vmem:[%s1 + $0x18] sm:$0xff]
        %v315 = vld [vmem:[%s2] sm:$0x1]
        %v317 = vlaneseq
        %v318 = vshrl.u32 %v317, 7
        %v319 = vsub.s32 0, %v318
        %v320 = vrot.slane %v315, %v319
        %vm322 = vcmask 261120
        %v324 = vsel %vm322, %v295, 0
        %v327 = vsel %vm322, %v296, 0
        %v330 = vsel %vm322, %v297, 0
        %v333 = vsel %vm322, %v298, 0
        %v336 = vsel %vm322, %v299, 0
        %v339 = vsel %vm322, %v300, 0
        %v342 = vsel %vm322, %v301, 0
        %v345 = vsel %vm322, %v302, 0
        %v348 = vsel %vm322, %v303, 0
        %v351 = vsel %vm322, %v304, 0
        %v354 = vsel %vm322, %v305, 0
        %v357 = vsel %vm322, %v306, 0
        %v360 = vsel %vm322, %v307, 0
        %v363 = vsel %vm322, %v308, 0
        %v366 = vsel %vm322, %v309, 0
        %v369 = vsel %vm322, %v310, 0
        %371 = vmatprep.subr.mxu0 0.0
        %372 = vmatpush1.msra.mxu0 %v311
        %373 = vmatprep.subr.mxu0 0.0
        %374 = vmatpush1.msra.mxu0 %v312
        %375 = vmatprep.subr.mxu0 0.0
        %376 = vmatpush1.msra.mxu0 %v313
        %377 = vmatprep.subr.mxu0 0.0
        %378 = vmatpush1.msra.mxu0 %v314
        %379 = vmatprep.subr.mxu0 0.0
        %380 = vmatpush1.msra.mxu0 0.0
        %381 = vmatprep.subr.mxu0 0.0
        %382 = vmatpush1.msra.mxu0 0.0
        %383 = vmatprep.subr.mxu0 0.0
        %384 = vmatpush1.msra.mxu0 0.0
        %385 = vmatprep.subr.mxu0 0.0
        %386 = vmatpush1.msra.mxu0 0.0
        %387 = vmatprep.subr.mxu0 0.0
        %388 = vmatpush1.msra.mxu0 0.0
        %389 = vmatprep.subr.mxu0 0.0
        %390 = vmatpush1.msra.mxu0 0.0
        %391 = vmatprep.subr.mxu0 0.0
        %392 = vmatpush1.msra.mxu0 0.0
        %393 = vmatprep.subr.mxu0 0.0
        %394 = vmatpush1.msra.mxu0 0.0
        %395 = vmatprep.subr.mxu0 0.0
        %396 = vmatpush1.msra.mxu0 0.0
        %397 = vmatprep.subr.mxu0 0.0
        %398 = vmatpush1.msra.mxu0 0.0
        %399 = vmatprep.subr.mxu0 0.0
        %400 = vmatpush1.msra.mxu0 0.0
        %401 = vmatprep.subr.mxu0 0.0
        %402 = vmatpush1.msra.mxu0 0.0
        %403 = vmatprep.subr.mxu0 0.0
        %404 = vmatpush1.msra.mxu0 0.0
        %405 = vmatprep.subr.mxu0 0.0
        %406 = vmatpush1.msra.mxu0 0.0
        %407 = vmatprep.subr.mxu0 0.0
        %408 = vmatpush1.msra.mxu0 0.0
        %409 = vmatprep.subr.mxu0 0.0
        %410 = vmatpush1.msra.mxu0 0.0
        %411 = vmatprep.subr.mxu0 0.0
        %412 = vmatpush1.msra.mxu0 0.0
        %413 = vmatprep.subr.mxu0 0.0
        %414 = vmatpush1.msra.mxu0 0.0
        %415 = vmatprep.subr.mxu0 0.0
        %416 = vmatpush1.msra.mxu0 0.0
        %417 = vmatprep.subr.mxu0 0.0
        %418 = vmatpush1.msra.mxu0 0.0
        %419 = vmatprep.subr.mxu0 0.0
        %420 = vmatpush1.msra.mxu0 0.0
        %421 = vmatprep.subr.mxu0 0.0
        %422 = vmatpush1.msra.mxu0 0.0
        %423 = vmatprep.subr.mxu0 0.0
        %424 = vmatpush1.msra.mxu0 0.0
        %425 = vmatprep.subr.mxu0 0.0
        %426 = vmatpush1.msra.mxu0 0.0
        %427 = vmatprep.subr.mxu0 0.0
        %428 = vmatpush1.msra.mxu0 0.0
        %429 = vmatprep.subr.mxu0 0.0
        %430 = vmatpush1.msra.mxu0 0.0
        %431 = vmatprep.subr.mxu0 0.0
        %432 = vmatpush1.msra.mxu0 0.0
        %433 = vmatprep.subr.mxu0 0.0
        %434 = vmatpush1.msra.mxu0 0.0
        %435 = vmatprep.mubr.f32.mxu0 0.0
        %436 = vmatmul.mubr.f32.gmra.mrb[0].mxu0 %v324
        %v437 = vpop.f32.mrb[0].mxu0
        %v438 = vadd.f32 %v320, %v437
        %v439 = vpop.f32.mrb[0].mxu0
        %440 = vmatprep.mubr.f32.mxu0 0.0
        %441 = vmatmul.mubr.f32.gmra.mrb[0].mxu0 %v327
        %v442 = vpop.f32.mrb[0].mxu0
        %v443 = vadd.f32 %v320, %v442
        %v444 = vpop.f32.mrb[0].mxu0
        %445 = vmatprep.mubr.f32.mxu0 0.0
        %446 = vmatmul.mubr.f32.gmra.mrb[0].mxu0 %v330
        %v447 = vpop.f32.mrb[0].mxu0
        %v448 = vadd.f32 %v320, %v447
        %v449 = vpop.f32.mrb[0].mxu0
        %450 = vmatprep.mubr.f32.mxu0 0.0
        %451 = vmatmul.mubr.f32.gmra.mrb[0].mxu0 %v333
        %v452 = vpop.f32.mrb[0].mxu0
        %v453 = vadd.f32 %v320, %v452
        %v454 = vpop.f32.mrb[0].mxu0
        %455 = vmatprep.mubr.f32.mxu0 0.0
        %456 = vmatmul.mubr.f32.gmra.mrb[0].mxu0 %v336
        %v457 = vpop.f32.mrb[0].mxu0
        %v458 = vadd.f32 %v320, %v457
        %v459 = vpop.f32.mrb[0].mxu0
        %460 = vmatprep.mubr.f32.mxu0 0.0
        %461 = vmatmul.mubr.f32.gmra.mrb[0].mxu0 %v339
        %v462 = vpop.f32.mrb[0].mxu0
        %v463 = vadd.f32 %v320, %v462
        %v464 = vpop.f32.mrb[0].mxu0
        %465 = vmatprep.mubr.f32.mxu0 0.0
        %466 = vmatmul.mubr.f32.gmra.mrb[0].mxu0 %v342
        %v467 = vpop.f32.mrb[0].mxu0
        %v468 = vadd.f32 %v320, %v467
        %v469 = vpop.f32.mrb[0].mxu0
        %470 = vmatprep.mubr.f32.mxu0 0.0
        %471 = vmatmul.mubr.f32.gmra.mrb[0].mxu0 %v345
        %v472 = vpop.f32.mrb[0].mxu0
        %v473 = vadd.f32 %v320, %v472
        %v474 = vpop.f32.mrb[0].mxu0
        %475 = vmatprep.mubr.f32.mxu0 0.0
        %476 = vmatmul.mubr.f32.gmra.mrb[0].mxu0 %v348
        %v477 = vpop.f32.mrb[0].mxu0
        %v478 = vadd.f32 %v320, %v477
        %v479 = vpop.f32.mrb[0].mxu0
        %480 = vmatprep.mubr.f32.mxu0 0.0
        %481 = vmatmul.mubr.f32.gmra.mrb[0].mxu0 %v351
        %v482 = vpop.f32.mrb[0].mxu0
        %v483 = vadd.f32 %v320, %v482
        %v484 = vpop.f32.mrb[0].mxu0
        %485 = vmatprep.mubr.f32.mxu0 0.0
        %486 = vmatmul.mubr.f32.gmra.mrb[0].mxu0 %v354
        %v487 = vpop.f32.mrb[0].mxu0
        %v488 = vadd.f32 %v320, %v487
        %v489 = vpop.f32.mrb[0].mxu0
        %490 = vmatprep.mubr.f32.mxu0 0.0
        %491 = vmatmul.mubr.f32.gmra.mrb[0].mxu0 %v357
        %v492 = vpop.f32.mrb[0].mxu0
        %v493 = vadd.f32 %v320, %v492
        %v494 = vpop.f32.mrb[0].mxu0
        %495 = vmatprep.mubr.f32.mxu0 0.0
        %496 = vmatmul.mubr.f32.gmra.mrb[0].mxu0 %v360
        %v497 = vpop.f32.mrb[0].mxu0
        %v498 = vadd.f32 %v320, %v497
        %v499 = vpop.f32.mrb[0].mxu0
        %500 = vmatprep.mubr.f32.mxu0 0.0
        %501 = vmatmul.mubr.f32.gmra.mrb[0].mxu0 %v363
        %v502 = vpop.f32.mrb[0].mxu0
        %v503 = vadd.f32 %v320, %v502
        %v504 = vpop.f32.mrb[0].mxu0
        %505 = vmatprep.mubr.f32.mxu0 0.0
        %506 = vmatmul.mubr.f32.gmra.mrb[0].mxu0 %v366
        %v507 = vpop.f32.mrb[0].mxu0
        %v508 = vadd.f32 %v320, %v507
        %v509 = vpop.f32.mrb[0].mxu0
        %510 = vmatprep.mubr.f32.mxu0 0.0
        %511 = vmatmul.mubr.f32.gmra.mrb[0].mxu0 %v369
        %v512 = vpop.f32.mrb[0].mxu0
        %v513 = vadd.f32 %v320, %v512
        %v514 = vpop.f32.mrb[0].mxu0
        %515 = vdwg.mxu0
        %v516 = vmax.f32 %v438, 0.0
        %v517 = vmax.f32 %v443, 0.0
        %v518 = vmax.f32 %v448, 0.0
        %v519 = vmax.f32 %v453, 0.0
        %v520 = vmax.f32 %v458, 0.0
        %v521 = vmax.f32 %v463, 0.0
        %v522 = vmax.f32 %v468, 0.0
        %v523 = vmax.f32 %v473, 0.0
        %v524 = vmax.f32 %v478, 0.0
        %v525 = vmax.f32 %v483, 0.0
        %v526 = vmax.f32 %v488, 0.0
        %v527 = vmax.f32 %v493, 0.0
        %v528 = vmax.f32 %v498, 0.0
        %v529 = vmax.f32 %v503, 0.0
        %v530 = vmax.f32 %v508, 0.0
        %v531 = vmax.f32 %v513, 0.0
        %v532 = vld [vmem:[%s3] sm:$0xff]
        %v533 = vld [vmem:[%s3 + $0x8] sm:$0xff]
        %v534 = vld [vmem:[%s3 + $0x10] sm:$0xff]
        %v535 = vld [vmem:[%s3 + $0x18] sm:$0xff]
        %v536 = vld [vmem:[%s3 + $0x20] sm:$0xff]
        %v537 = vld [vmem:[%s3 + $0x28] sm:$0xff]
        %v538 = vld [vmem:[%s3 + $0x30] sm:$0xff]
        %v539 = vld [vmem:[%s3 + $0x38] sm:$0xff]
        %v540 = vld [vmem:[%s3 + $0x40] sm:$0xff]
        %v541 = vld [vmem:[%s3 + $0x48] sm:$0xff]
        %v542 = vld [vmem:[%s3 + $0x50] sm:$0xff]
        %v543 = vld [vmem:[%s3 + $0x58] sm:$0xff]
        %v544 = vld [vmem:[%s3 + $0x60] sm:$0xff]
        %v545 = vld [vmem:[%s3 + $0x68] sm:$0xff]
        %v546 = vld [vmem:[%s3 + $0x70] sm:$0xff]
        %v547 = vld [vmem:[%s3 + $0x78] sm:$0xff]
        %v548 = vld [vmem:[%s3 + $0x80] sm:$0xff]
        %v549 = vld [vmem:[%s3 + $0x88] sm:$0xff]
        %v550 = vld [vmem:[%s3 + $0x90] sm:$0xff]
        %v551 = vld [vmem:[%s3 + $0x98] sm:$0xff]
        %v552 = vld [vmem:[%s3 + $0xa0] sm:$0xff]
        %v553 = vld [vmem:[%s3 + $0xa8] sm:$0xff]
        %v554 = vld [vmem:[%s3 + $0xb0] sm:$0xff]
        %v555 = vld [vmem:[%s3 + $0xb8] sm:$0xff]
        %v556 = vld [vmem:[%s3 + $0xc0] sm:$0xff]
        %v557 = vld [vmem:[%s3 + $0xc8] sm:$0xff]
        %v558 = vld [vmem:[%s3 + $0xd0] sm:$0xff]
        %v559 = vld [vmem:[%s3 + $0xd8] sm:$0xff]
        %v560 = vld [vmem:[%s3 + $0xe0] sm:$0xff]
        %v561 = vld [vmem:[%s3 + $0xe8] sm:$0xff]
        %v562 = vld [vmem:[%s3 + $0xf0] sm:$0xff]
        %v563 = vld [vmem:[%s3 + $0xf8] sm:$0xff]
        %v564 = vld [vmem:[%s4] sm:$0x3]
        %v566 = vlaneseq
        %v567 = vshrl.u32 %v566, 7
        %v568 = vsub.s32 0, %v567
        %v569 = vrot.slane %v564, %v568
        %v570 = vlaneseq
        %v571 = vshrl.u32 %v570, 7
        %v572 = vsub.s32 1, %v571
        %v573 = vrot.slane %v564, %v572
        %576 = vmatprep.subr.mxu0 %v533
        %577 = vmatpush1.msra.mxu0 %v532
        %578 = vmatprep.subr.mxu0 %v535
        %579 = vmatpush1.msra.mxu0 %v534
        %580 = vmatprep.subr.mxu0 %v537
        %581 = vmatpush1.msra.mxu0 %v536
        %582 = vmatprep.subr.mxu0 %v539
        %583 = vmatpush1.msra.mxu0 %v538
        %584 = vmatprep.subr.mxu0 %v541
        %585 = vmatpush1.msra.mxu0 %v540
        %586 = vmatprep.subr.mxu0 %v543
        %587 = vmatpush1.msra.mxu0 %v542
        %588 = vmatprep.subr.mxu0 %v545
        %589 = vmatpush1.msra.mxu0 %v544
        %590 = vmatprep.subr.mxu0 %v547
        %591 = vmatpush1.msra.mxu0 %v546
        %592 = vmatprep.subr.mxu0 %v549
        %593 = vmatpush1.msra.mxu0 %v548
        %594 = vmatprep.subr.mxu0 %v551
        %595 = vmatpush1.msra.mxu0 %v550
        %596 = vmatprep.subr.mxu0 %v553
        %597 = vmatpush1.msra.mxu0 %v552
        %598 = vmatprep.subr.mxu0 %v555
        %599 = vmatpush1.msra.mxu0 %v554
        %600 = vmatprep.subr.mxu0 %v557
        %601 = vmatpush1.msra.mxu0 %v556
        %602 = vmatprep.subr.mxu0 %v559
        %603 = vmatpush1.msra.mxu0 %v558
        %604 = vmatprep.subr.mxu0 %v561
        %605 = vmatpush1.msra.mxu0 %v560
        %606 = vmatprep.subr.mxu0 %v563
        %607 = vmatpush1.msra.mxu0 %v562
        %608 = vmatprep.subr.mxu0 0.0
        %609 = vmatpush1.msra.mxu0 0.0
        %610 = vmatprep.subr.mxu0 0.0
        %611 = vmatpush1.msra.mxu0 0.0
        %612 = vmatprep.subr.mxu0 0.0
        %613 = vmatpush1.msra.mxu0 0.0
        %614 = vmatprep.subr.mxu0 0.0
        %615 = vmatpush1.msra.mxu0 0.0
        %616 = vmatprep.subr.mxu0 0.0
        %617 = vmatpush1.msra.mxu0 0.0
        %618 = vmatprep.subr.mxu0 0.0
        %619 = vmatpush1.msra.mxu0 0.0
        %620 = vmatprep.subr.mxu0 0.0
        %621 = vmatpush1.msra.mxu0 0.0
        %622 = vmatprep.subr.mxu0 0.0
        %623 = vmatpush1.msra.mxu0 0.0
        %624 = vmatprep.subr.mxu0 0.0
        %625 = vmatpush1.msra.mxu0 0.0
        %626 = vmatprep.subr.mxu0 0.0
        %627 = vmatpush1.msra.mxu0 0.0
        %628 = vmatprep.subr.mxu0 0.0
        %629 = vmatpush1.msra.mxu0 0.0
        %630 = vmatprep.subr.mxu0 0.0
        %631 = vmatpush1.msra.mxu0 0.0
        %632 = vmatprep.subr.mxu0 0.0
        %633 = vmatpush1.msra.mxu0 0.0
        %634 = vmatprep.subr.mxu0 0.0
        %635 = vmatpush1.msra.mxu0 0.0
        %636 = vmatprep.subr.mxu0 0.0
        %637 = vmatpush1.msra.mxu0 0.0
        %638 = vmatprep.subr.mxu0 0.0
        %639 = vmatpush1.msra.mxu0 0.0
        %640 = vmatprep.mubr.f32.mxu0 0.0
        %641 = vmatmul.mubr.f32.gmra.mrb[0].mxu0 %v516
        %v642 = vpop.f32.mrb[0].mxu0
        %v643 = vadd.f32 %v569, %v642
        %v644 = vpop.f32.mrb[0].mxu0
        %v645 = vadd.f32 %v573, %v644
        %646 = vmatprep.mubr.f32.mxu0 0.0
        %647 = vmatmul.mubr.f32.gmra.mrb[0].mxu0 %v517
        %v648 = vpop.f32.mrb[0].mxu0
        %v649 = vadd.f32 %v569, %v648
        %v650 = vpop.f32.mrb[0].mxu0
        %v651 = vadd.f32 %v573, %v650
        %652 = vmatprep.mubr.f32.mxu0 0.0
        %653 = vmatmul.mubr.f32.gmra.mrb[0].mxu0 %v518
        %v654 = vpop.f32.mrb[0].mxu0
        %v655 = vadd.f32 %v569, %v654
        %v656 = vpop.f32.mrb[0].mxu0
        %v657 = vadd.f32 %v573, %v656
        %658 = vmatprep.mubr.f32.mxu0 0.0
        %659 = vmatmul.mubr.f32.gmra.mrb[0].mxu0 %v519
        %v660 = vpop.f32.mrb[0].mxu0
        %v661 = vadd.f32 %v569, %v660
        %v662 = vpop.f32.mrb[0].mxu0
        %v663 = vadd.f32 %v573, %v662
        %664 = vmatprep.mubr.f32.mxu0 0.0
        %665 = vmatmul.mubr.f32.gmra.mrb[0].mxu0 %v520
        %v666 = vpop.f32.mrb[0].mxu0
        %v667 = vadd.f32 %v569, %v666
        %v668 = vpop.f32.mrb[0].mxu0
        %v669 = vadd.f32 %v573, %v668
        %670 = vmatprep.mubr.f32.mxu0 0.0
        %671 = vmatmul.mubr.f32.gmra.mrb[0].mxu0 %v521
        %v672 = vpop.f32.mrb[0].mxu0
        %v673 = vadd.f32 %v569, %v672
        %v674 = vpop.f32.mrb[0].mxu0
        %v675 = vadd.f32 %v573, %v674
        %676 = vmatprep.mubr.f32.mxu0 0.0
        %677 = vmatmul.mubr.f32.gmra.mrb[0].mxu0 %v522
        %v678 = vpop.f32.mrb[0].mxu0
        %v679 = vadd.f32 %v569, %v678
        %v680 = vpop.f32.mrb[0].mxu0
        %v681 = vadd.f32 %v573, %v680
        %682 = vmatprep.mubr.f32.mxu0 0.0
        %683 = vmatmul.mubr.f32.gmra.mrb[0].mxu0 %v523
        %v684 = vpop.f32.mrb[0].mxu0
        %v685 = vadd.f32 %v569, %v684
        %v686 = vpop.f32.mrb[0].mxu0
        %v687 = vadd.f32 %v573, %v686
        %688 = vmatprep.mubr.f32.mxu0 0.0
        %689 = vmatmul.mubr.f32.gmra.mrb[0].mxu0 %v524
        %v690 = vpop.f32.mrb[0].mxu0
        %v691 = vadd.f32 %v569, %v690
        %v692 = vpop.f32.mrb[0].mxu0
        %v693 = vadd.f32 %v573, %v692
        %694 = vmatprep.mubr.f32.mxu0 0.0
        %695 = vmatmul.mubr.f32.gmra.mrb[0].mxu0 %v525
        %v696 = vpop.f32.mrb[0].mxu0
        %v697 = vadd.f32 %v569, %v696
        %v698 = vpop.f32.mrb[0].mxu0
        %v699 = vadd.f32 %v573, %v698
        %700 = vmatprep.mubr.f32.mxu0 0.0
        %701 = vmatmul.mubr.f32.gmra.mrb[0].mxu0 %v526
        %v702 = vpop.f32.mrb[0].mxu0
        %v703 = vadd.f32 %v569, %v702
        %v704 = vpop.f32.mrb[0].mxu0
        %v705 = vadd.f32 %v573, %v704
        %706 = vmatprep.mubr.f32.mxu0 0.0
        %707 = vmatmul.mubr.f32.gmra.mrb[0].mxu0 %v527
        %v708 = vpop.f32.mrb[0].mxu0
        %v709 = vadd.f32 %v569, %v708
        %v710 = vpop.f32.mrb[0].mxu0
        %v711 = vadd.f32 %v573, %v710
        %712 = vmatprep.mubr.f32.mxu0 0.0
        %713 = vmatmul.mubr.f32.gmra.mrb[0].mxu0 %v528
        %v714 = vpop.f32.mrb[0].mxu0
        %v715 = vadd.f32 %v569, %v714
        %v716 = vpop.f32.mrb[0].mxu0
        %v717 = vadd.f32 %v573, %v716
        %718 = vmatprep.mubr.f32.mxu0 0.0
        %719 = vmatmul.mubr.f32.gmra.mrb[0].mxu0 %v529
        %v720 = vpop.f32.mrb[0].mxu0
        %v721 = vadd.f32 %v569, %v720
        %v722 = vpop.f32.mrb[0].mxu0
        %v723 = vadd.f32 %v573, %v722
        %724 = vmatprep.mubr.f32.mxu0 0.0
        %725 = vmatmul.mubr.f32.gmra.mrb[0].mxu0 %v530
        %v726 = vpop.f32.mrb[0].mxu0
        %v727 = vadd.f32 %v569, %v726
        %v728 = vpop.f32.mrb[0].mxu0
        %v729 = vadd.f32 %v573, %v728
        %730 = vmatprep.mubr.f32.mxu0 0.0
        %731 = vmatmul.mubr.f32.gmra.mrb[0].mxu0 %v531
        %v732 = vpop.f32.mrb[0].mxu0
        %v733 = vadd.f32 %v569, %v732
        %v734 = vpop.f32.mrb[0].mxu0
        %v735 = vadd.f32 %v573, %v734
        %736 = vdwg.mxu0
        %v737 = vmax.f32 %v643, 0.0
        %v738 = vmax.f32 %v645, 0.0
        %v739 = vmax.f32 %v649, 0.0
        %v740 = vmax.f32 %v651, 0.0
        %v741 = vmax.f32 %v655, 0.0
        %v742 = vmax.f32 %v657, 0.0
        %v743 = vmax.f32 %v661, 0.0
        %v744 = vmax.f32 %v663, 0.0
        %v745 = vmax.f32 %v667, 0.0
        %v746 = vmax.f32 %v669, 0.0
        %v747 = vmax.f32 %v673, 0.0
        %v748 = vmax.f32 %v675, 0.0
        %v749 = vmax.f32 %v679, 0.0
        %v750 = vmax.f32 %v681, 0.0
        %v751 = vmax.f32 %v685, 0.0
        %v752 = vmax.f32 %v687, 0.0
        %v753 = vmax.f32 %v691, 0.0
        %v754 = vmax.f32 %v693, 0.0
        %v755 = vmax.f32 %v697, 0.0
        %v756 = vmax.f32 %v699, 0.0
        %v757 = vmax.f32 %v703, 0.0
        %v758 = vmax.f32 %v705, 0.0
        %v759 = vmax.f32 %v709, 0.0
        %v760 = vmax.f32 %v711, 0.0
        %v761 = vmax.f32 %v715, 0.0
        %v762 = vmax.f32 %v717, 0.0
        %v763 = vmax.f32 %v721, 0.0
        %v764 = vmax.f32 %v723, 0.0
        %v765 = vmax.f32 %v727, 0.0
        %v766 = vmax.f32 %v729, 0.0
        %v767 = vmax.f32 %v733, 0.0
        %v768 = vmax.f32 %v735, 0.0
        %v769 = vld [vmem:[#allocation2] sm:$0xff]
        %v770 = vld [vmem:[#allocation2 + $0x8] sm:$0xff]
        %v771 = vld [vmem:[#allocation2 + $0x10] sm:$0xff]
        %v772 = vld [vmem:[#allocation2 + $0x18] sm:$0xff]
        %v773 = vld [vmem:[#allocation2 + $0x20] sm:$0xff]
        %v774 = vld [vmem:[#allocation2 + $0x28] sm:$0xff]
        %v775 = vld [vmem:[#allocation2 + $0x30] sm:$0xff]
        %v776 = vld [vmem:[#allocation2 + $0x38] sm:$0xff]
        %v777 = vld [vmem:[#allocation2 + $0x40] sm:$0xff]
        %v778 = vld [vmem:[#allocation2 + $0x48] sm:$0xff]
        %v779 = vld [vmem:[#allocation2 + $0x50] sm:$0xff]
        %v780 = vld [vmem:[#allocation2 + $0x58] sm:$0xff]
        %v781 = vld [vmem:[#allocation2 + $0x60] sm:$0xff]
        %v782 = vld [vmem:[#allocation2 + $0x68] sm:$0xff]
        %v783 = vld [vmem:[#allocation2 + $0x70] sm:$0xff]
        %v784 = vld [vmem:[#allocation2 + $0x78] sm:$0xff]
        %v785 = vld [vmem:[#allocation2 + $0x80] sm:$0xff]
        %v786 = vld [vmem:[#allocation2 + $0x88] sm:$0xff]
        %v787 = vld [vmem:[#allocation2 + $0x90] sm:$0xff]
        %v788 = vld [vmem:[#allocation2 + $0x98] sm:$0xff]
        %v789 = vld [vmem:[#allocation2 + $0xa0] sm:$0xff]
        %v790 = vld [vmem:[#allocation2 + $0xa8] sm:$0xff]
        %v791 = vld [vmem:[#allocation2 + $0xb0] sm:$0xff]
        %v792 = vld [vmem:[#allocation2 + $0xb8] sm:$0xff]
        %v793 = vld [vmem:[#allocation2 + $0xc0] sm:$0xff]
        %v794 = vld [vmem:[#allocation2 + $0xc8] sm:$0xff]
        %v795 = vld [vmem:[#allocation2 + $0xd0] sm:$0xff]
        %v796 = vld [vmem:[#allocation2 + $0xd8] sm:$0xff]
        %v797 = vld [vmem:[#allocation2 + $0xe0] sm:$0xff]
        %v798 = vld [vmem:[#allocation2 + $0xe8] sm:$0xff]
        %v799 = vld [vmem:[#allocation2 + $0xf0] sm:$0xff]
        %v800 = vld [vmem:[#allocation2 + $0xf8] sm:$0xff]
        %v801 = vld [vmem:[%s6] sm:$0x1]
        %v803 = vlaneseq
        %v804 = vshrl.u32 %v803, 7
        %v805 = vsub.s32 0, %v804
        %v806 = vrot.slane %v801, %v805
        %808 = vmatprep.subr.mxu0 0.0
        %809 = vmatpush1.msra.mxu0 %v769
        %810 = vmatprep.subr.mxu0 0.0
        %811 = vmatpush1.msra.mxu0 %v770
        %812 = vmatprep.subr.mxu0 0.0
        %813 = vmatpush1.msra.mxu0 %v771
        %814 = vmatprep.subr.mxu0 0.0
        %815 = vmatpush1.msra.mxu0 %v772
        %816 = vmatprep.subr.mxu0 0.0
        %817 = vmatpush1.msra.mxu0 %v773
        %818 = vmatprep.subr.mxu0 0.0
        %819 = vmatpush1.msra.mxu0 %v774
        %820 = vmatprep.subr.mxu0 0.0
        %821 = vmatpush1.msra.mxu0 %v775
        %822 = vmatprep.subr.mxu0 0.0
        %823 = vmatpush1.msra.mxu0 %v776
        %824 = vmatprep.subr.mxu0 0.0
        %825 = vmatpush1.msra.mxu0 %v777
        %826 = vmatprep.subr.mxu0 0.0
        %827 = vmatpush1.msra.mxu0 %v778
        %828 = vmatprep.subr.mxu0 0.0
        %829 = vmatpush1.msra.mxu0 %v779
        %830 = vmatprep.subr.mxu0 0.0
        %831 = vmatpush1.msra.mxu0 %v780
        %832 = vmatprep.subr.mxu0 0.0
        %833 = vmatpush1.msra.mxu0 %v781
        %834 = vmatprep.subr.mxu0 0.0
        %835 = vmatpush1.msra.mxu0 %v782
        %836 = vmatprep.subr.mxu0 0.0
        %837 = vmatpush1.msra.mxu0 %v783
        %838 = vmatprep.subr.mxu0 0.0
        %839 = vmatpush1.msra.mxu0 %v784
        %840 = vmatprep.subr.mxu0 0.0
        %841 = vmatpush1.msra.mxu0 %v785
        %842 = vmatprep.subr.mxu0 0.0
        %843 = vmatpush1.msra.mxu0 %v786
        %844 = vmatprep.subr.mxu0 0.0
        %845 = vmatpush1.msra.mxu0 %v787
        %846 = vmatprep.subr.mxu0 0.0
        %847 = vmatpush1.msra.mxu0 %v788
        %848 = vmatprep.subr.mxu0 0.0
        %849 = vmatpush1.msra.mxu0 %v789
        %850 = vmatprep.subr.mxu0 0.0
        %851 = vmatpush1.msra.mxu0 %v790
        %852 = vmatprep.subr.mxu0 0.0
        %853 = vmatpush1.msra.mxu0 %v791
        %854 = vmatprep.subr.mxu0 0.0
        %855 = vmatpush1.msra.mxu0 %v792
        %856 = vmatprep.subr.mxu0 0.0
        %857 = vmatpush1.msra.mxu0 %v793
        %858 = vmatprep.subr.mxu0 0.0
        %859 = vmatpush1.msra.mxu0 %v794
        %860 = vmatprep.subr.mxu0 0.0
        %861 = vmatpush1.msra.mxu0 %v795
        %862 = vmatprep.subr.mxu0 0.0
        %863 = vmatpush1.msra.mxu0 %v796
        %864 = vmatprep.subr.mxu0 0.0
        %865 = vmatpush1.msra.mxu0 %v797
        %866 = vmatprep.subr.mxu0 0.0
        %867 = vmatpush1.msra.mxu0 %v798
        %868 = vmatprep.subr.mxu0 0.0
        %869 = vmatpush1.msra.mxu0 %v799
        %870 = vmatprep.subr.mxu0 0.0
        %871 = vmatpush1.msra.mxu0 %v800
        %872 = vmatprep.mubr.f32.mxu0 %v738
        %873 = vmatmul.mubr.f32.gmra.mrb[0].mxu0 %v737
        %v874 = vpop.f32.mrb[0].mxu0
        %v875 = vadd.f32 %v806, %v874
        %v876 = vpop.f32.mrb[0].mxu0
        %877 = vmatprep.mubr.f32.mxu0 %v740
        %878 = vmatmul.mubr.f32.gmra.mrb[0].mxu0 %v739
        %v879 = vpop.f32.mrb[0].mxu0
        %v880 = vadd.f32 %v806, %v879
        %v881 = vpop.f32.mrb[0].mxu0
        %882 = vmatprep.mubr.f32.mxu0 %v742
        %883 = vmatmul.mubr.f32.gmra.mrb[0].mxu0 %v741
        %v884 = vpop.f32.mrb[0].mxu0
        %v885 = vadd.f32 %v806, %v884
        %v886 = vpop.f32.mrb[0].mxu0
        %887 = vmatprep.mubr.f32.mxu0 %v744
        %888 = vmatmul.mubr.f32.gmra.mrb[0].mxu0 %v743
        %v889 = vpop.f32.mrb[0].mxu0
        %v890 = vadd.f32 %v806, %v889
        %v891 = vpop.f32.mrb[0].mxu0
        %892 = vmatprep.mubr.f32.mxu0 %v746
        %893 = vmatmul.mubr.f32.gmra.mrb[0].mxu0 %v745
        %v894 = vpop.f32.mrb[0].mxu0
        %v895 = vadd.f32 %v806, %v894
        %v896 = vpop.f32.mrb[0].mxu0
        %897 = vmatprep.mubr.f32.mxu0 %v748
        %898 = vmatmul.mubr.f32.gmra.mrb[0].mxu0 %v747
        %v899 = vpop.f32.mrb[0].mxu0
        %v900 = vadd.f32 %v806, %v899
        %v901 = vpop.f32.mrb[0].mxu0
        %902 = vmatprep.mubr.f32.mxu0 %v750
        %903 = vmatmul.mubr.f32.gmra.mrb[0].mxu0 %v749
        %v904 = vpop.f32.mrb[0].mxu0
        %v905 = vadd.f32 %v806, %v904
        %v906 = vpop.f32.mrb[0].mxu0
        %907 = vmatprep.mubr.f32.mxu0 %v752
        %908 = vmatmul.mubr.f32.gmra.mrb[0].mxu0 %v751
        %v909 = vpop.f32.mrb[0].mxu0
        %v910 = vadd.f32 %v806, %v909
        %v911 = vpop.f32.mrb[0].mxu0
        %912 = vmatprep.mubr.f32.mxu0 %v754
        %913 = vmatmul.mubr.f32.gmra.mrb[0].mxu0 %v753
        %v914 = vpop.f32.mrb[0].mxu0
        %v915 = vadd.f32 %v806, %v914
        %v916 = vpop.f32.mrb[0].mxu0
        %917 = vmatprep.mubr.f32.mxu0 %v756
        %918 = vmatmul.mubr.f32.gmra.mrb[0].mxu0 %v755
        %v919 = vpop.f32.mrb[0].mxu0
        %v920 = vadd.f32 %v806, %v919
        %v921 = vpop.f32.mrb[0].mxu0
        %922 = vmatprep.mubr.f32.mxu0 %v758
        %923 = vmatmul.mubr.f32.gmra.mrb[0].mxu0 %v757
        %v924 = vpop.f32.mrb[0].mxu0
        %v925 = vadd.f32 %v806, %v924
        %v926 = vpop.f32.mrb[0].mxu0
        %927 = vmatprep.mubr.f32.mxu0 %v760
        %928 = vmatmul.mubr.f32.gmra.mrb[0].mxu0 %v759
        %v929 = vpop.f32.mrb[0].mxu0
        %v930 = vadd.f32 %v806, %v929
        %v931 = vpop.f32.mrb[0].mxu0
        %932 = vmatprep.mubr.f32.mxu0 %v762
        %933 = vmatmul.mubr.f32.gmra.mrb[0].mxu0 %v761
        %v934 = vpop.f32.mrb[0].mxu0
        %v935 = vadd.f32 %v806, %v934
        %v936 = vpop.f32.mrb[0].mxu0
        %937 = vmatprep.mubr.f32.mxu0 %v764
        %938 = vmatmul.mubr.f32.gmra.mrb[0].mxu0 %v763
        %v939 = vpop.f32.mrb[0].mxu0
        %v940 = vadd.f32 %v806, %v939
        %v941 = vpop.f32.mrb[0].mxu0
        %942 = vmatprep.mubr.f32.mxu0 %v766
        %943 = vmatmul.mubr.f32.gmra.mrb[0].mxu0 %v765
        %v944 = vpop.f32.mrb[0].mxu0
        %v945 = vadd.f32 %v806, %v944
        %v946 = vpop.f32.mrb[0].mxu0
        %947 = vmatprep.mubr.f32.mxu0 %v768
        %948 = vmatmul.mubr.f32.gmra.mrb[0].mxu0 %v767
        %v949 = vpop.f32.mrb[0].mxu0
        %v950 = vadd.f32 %v806, %v949
        %v951 = vpop.f32.mrb[0].mxu0
        %952 = vdwg.mxu0
        %953 = vst [vmem:[%s287] sm:$0xff] %v875
        %954 = vst [vmem:[%s287 + $0x8] sm:$0xff] %v880
        %955 = vst [vmem:[%s287 + $0x10] sm:$0xff] %v885
        %956 = vst [vmem:[%s287 + $0x18] sm:$0xff] %v890
        %957 = vst [vmem:[%s287 + $0x20] sm:$0xff] %v895
        %958 = vst [vmem:[%s287 + $0x28] sm:$0xff] %v900
        %959 = vst [vmem:[%s287 + $0x30] sm:$0xff] %v905
        %960 = vst [vmem:[%s287 + $0x38] sm:$0xff] %v910
        %961 = vst [vmem:[%s287 + $0x40] sm:$0xff] %v915
        %962 = vst [vmem:[%s287 + $0x48] sm:$0xff] %v920
        %963 = vst [vmem:[%s287 + $0x50] sm:$0xff] %v925
        %964 = vst [vmem:[%s287 + $0x58] sm:$0xff] %v930
        %965 = vst [vmem:[%s287 + $0x60] sm:$0xff] %v935
        %966 = vst [vmem:[%s287 + $0x68] sm:$0xff] %v940
        %967 = vst [vmem:[%s287 + $0x70] sm:$0xff] %v945
        %968 = vst [vmem:[%s287 + $0x78] sm:$0xff] %v950
        %s969 = sand.u32 %s182, 1
        %s970 = scalar_lea.sflag [#allocation4], %s969
        %s971 = sand.u32 %s182, 1
        %s972 = smul.addr %s971, 128
        %s973 = scalar_lea.vmem [#allocation5], %s972
        // Predicated region
        $region53: #{tpu_custom_call.1} parent=47 // pred_check
          %p974 = pneg %p192
        $region54: #{tpu_custom_call.1} parent=47 // pred_check_branch
          %976 = sbr.rel (%p974) target = $region56
        $region55: #{tpu_custom_call.1} parent=47 // pred_region
          %s977 = smul.u32 16, %s22
          %s979 = ssub.s32 2048, 2048
          %980 = vsyncadd %s970, %s979
          %s981 = smul.addr %s977, 128
          %s982 = scalar_lea.hbm %s7, %s981
          %s983 = sshll.u32 %s973, 4
          %s984 = int_to_ptr.vmem [resolvable:$true] %s983
          %989 = dma.vmem_to_hbm [thread:$0]  %s984, 2048, %s982, %s970, 128, 128, 8
        $region56: #{tpu_custom_call.1} parent=47 // pred_fallthru
          _
      $region48: #{tpu_custom_call.1} parent=5 // pred_fallthru
        _
      %p990 = scmp.le.s32.totalorder 2, %s17
      // Predicated region
      $region57: #{tpu_custom_call.1} parent=5 // pred_check
        %p991 = pneg %p990
      $region58: #{tpu_custom_call.1} parent=5 // pred_check_branch
        %993 = sbr.rel (%p991) target = $region60
      $region59: #{tpu_custom_call.1} parent=5 // pred_region
        %s994 = ssub.s32 %s17, 2
        // Predicated region
        $region61: #{tpu_custom_call.1} parent=59 // pred_check
          %p995 = pneg %p198
        $region62: #{tpu_custom_call.1} parent=59 // pred_check_branch
          %997 = sbr.rel (%p995) target = $region64
        $region63: #{tpu_custom_call.1} parent=59 // pred_region
          %s998 = sand.u32 %s183, 1
          %s999 = scalar_lea.sflag [#allocation4], %s998
          %s1000 = sand.u32 %s183, 1
          %s1001 = smul.addr %s1000, 128
          %s1002 = scalar_lea.vmem [#allocation5], %s1001
          %1003 = dma.done %s999, 2048
        $region64: #{tpu_custom_call.1} parent=59 // pred_fallthru
          _
      $region60: #{tpu_custom_call.1} parent=5 // pred_fallthru
        _
    $region6: #{tpu_custom_call.1} parent=1 // loop_footer
      %s21 = sadd.s32 1, %s17
    $region7: #{tpu_custom_call.1} parent=1 // loop_footer_branch
      %16 = sbr.rel target = $region3
    $region8: #{tpu_custom_call.1} parent=1 // loop_exit
      _
    %1004 = vsyncpa [#allocation3], 1
    %s1005 = scalar_lea.sflag [#allocation3], 1
    %1006 = vsyncpa %s1005, 1
    %1007 = vsyncpa [#allocation4], 1
    %s1008 = scalar_lea.sflag [#allocation4], 1
    %1009 = vsyncpa %s1008, 1

</llo_original>
